<compile_context>
chip_gen: v7x
topology: tpu7x:2x2x1
jax: 0.10.0
libtpu: 0.0.40
codegen_flags: <defaults>
</compile_context>

<pallas_src>
import functools
import math

import jax
import jax.numpy as jnp
from jax import lax
from jax.experimental import pallas as pl
from jax.experimental.pallas import tpu as pltpu

_NEG_BIG = -1e30  # finite mask value (avoids inf-inf -> NaN)


@functools.lru_cache(maxsize=1)
def _vmem_limit_bytes():
    """Generation-aware scoped-VMEM budget (~3/4 of physical VMEM)."""
    try:
        cap = getattr(pltpu.get_tpu_info(), "vmem_capacity_bytes", None)
        if cap:
            return max(32 * 1024 * 1024, min(int(cap) * 3 // 4, 100 * 1024 * 1024))
    except Exception:
        pass
    return 48 * 1024 * 1024  # conservative fallback (safe on v7x's 64 MiB)


def _compiler_params(semantics):
    return pltpu.CompilerParams(
        dimension_semantics=semantics, vmem_limit_bytes=_vmem_limit_bytes())


def _pick_tile(total, desired):
    """Largest tile <= desired that divides `total` and satisfies the (8,.) rule."""
    if total <= desired:
        return total
    for cand in range(min(desired, total), 0, -1):
        if total % cand == 0 and cand % 8 == 0:
            return cand
    return total


# ---------------------------------------------------------------------------
# Stage 1: qkv = x @ W_qkv + b_qkv, emitted as one (B, 3, nh, T, hd) array.
# ---------------------------------------------------------------------------
def _qkv_proj_kernel(x_ref, w_ref, b_ref, o_ref, *, n_head):
    x = x_ref[0]                                    # (t_tile, C) bf16
    w = w_ref[...]                                  # (C, 3C)    bf16
    b = b_ref[0]                                    # (3C,)      f32
    C = x.shape[1]
    hd = C // n_head

    qkv = jnp.dot(x, w, preferred_element_type=jnp.float32) + b   # (t_tile, 3C) f32

    # Static per-(kind, head) column slices -> (t_tile, hd) writes; no transpose.
    for s in range(3):
        for h in range(n_head):
            col = s * C + h * hd
            o_ref[0, s, h] = qkv[:, col:col + hd].astype(o_ref.dtype)


def _qkv_projection(x, w_qkv, b_qkv, n_head, t_tile):
    B, T, C = x.shape
    hd = C // n_head
    kernel = functools.partial(_qkv_proj_kernel, n_head=n_head)
    return pl.pallas_call(
        kernel,
        out_shape=jax.ShapeDtypeStruct((B, 3, n_head, T, hd), x.dtype),
        grid_spec=pltpu.PrefetchScalarGridSpec(
            num_scalar_prefetch=0,
            grid=(B, T // t_tile),
            in_specs=[
                pl.BlockSpec((1, t_tile, C), lambda b, ti: (b, ti, 0)),
                pl.BlockSpec((C, 3 * C), lambda b, ti: (0, 0)),
                pl.BlockSpec((1, 3 * C), lambda b, ti: (0, 0)),
            ],
            out_specs=pl.BlockSpec((1, 3, n_head, t_tile, hd),
                                   lambda b, ti: (b, 0, 0, ti, 0)),
        ),
        compiler_params=_compiler_params(("parallel", "parallel")),
    )(x, w_qkv, b_qkv)


# ---------------------------------------------------------------------------
# Stage 2: flash-style causal attention; kv loop folded into the kernel.
#          Grid (B, head, q-tile); K/V are full-T VMEM-resident blocks.
# ---------------------------------------------------------------------------
def _flash_attn_kernel(q_ref, k_ref, v_ref, o_ref, m_sc, l_sc, acc_sc,
                       *, blk, scale):
    qi = pl.program_id(2)
    q = q_ref[0, 0, 0]                              # (blk, hd) bf16

    m_sc[...] = jnp.full_like(m_sc, _NEG_BIG)
    l_sc[...] = jnp.zeros_like(l_sc)
    acc_sc[...] = jnp.zeros_like(acc_sc)

    def step(start, masked):
        k = k_ref[0, 0, 0, pl.ds(start, blk), :]    # (blk, hd) bf16
        v = v_ref[0, 0, 0, pl.ds(start, blk), :]    # (blk, hd) bf16
        # q @ k^T on the MXU, f32 accumulation; operands stay bf16.
        s = lax.dot_general(q, k, (((1,), (1,)), ((), ())),
                            preferred_element_type=jnp.float32) * scale
        if masked:
            # Diagonal tile: local row/col iota suffices (same tile offset).
            row = lax.broadcasted_iota(jnp.int32, (blk, blk), 0)
            col = lax.broadcasted_iota(jnp.int32, (blk, blk), 1)
            s = jnp.where(row >= col, s, _NEG_BIG)
        m_prev = m_sc[...]
        m_new = jnp.maximum(m_prev, s.max(axis=-1, keepdims=True))
        alpha = jnp.exp(m_prev - m_new)
        p = jnp.exp(s - m_new)
        l_sc[...] = alpha * l_sc[...] + p.sum(axis=-1, keepdims=True)
        acc_sc[...] = alpha * acc_sc[...] + jnp.dot(
            p.astype(v.dtype), v, preferred_element_type=jnp.float32)
        m_sc[...] = m_new

    # Interior kv tiles (fully below the diagonal): no mask work at all.
    # Dynamic causal trip count replaces per-tile grid steps / pl.when skips.
    @pl.loop(0, qi)
    def _(ki):
        step(pl.multiple_of(ki * blk, blk), masked=False)

    # Diagonal-straddling tile (always present): masked path.
    step(pl.multiple_of(qi * blk, blk), masked=True)

    inv_l = pl.reciprocal(l_sc[...], approx=True)
    o_ref[0, 0] = (acc_sc[...] * inv_l).astype(o_ref.dtype)


def _flash_attention(qkv, blk):
    B, _, nh, T, hd = qkv.shape
    scale = 1.0 / math.sqrt(hd)
    kernel = functools.partial(_flash_attn_kernel, blk=blk, scale=scale)
    return pl.pallas_call(
        kernel,
        out_shape=jax.ShapeDtypeStruct((B, nh, T, hd), qkv.dtype),
        grid_spec=pltpu.PrefetchScalarGridSpec(
            num_scalar_prefetch=0,
            grid=(B, nh, T // blk),
            in_specs=[
                # Q: one (blk, hd) tile per step.
                pl.BlockSpec((1, 1, 1, blk, hd), lambda b, h, qi: (b, 0, h, qi, 0)),
                # K, V: full-T blocks, constant across the q-tile axis, so they
                # are DMA'd once per (b, head) and reused for every q tile.
                pl.BlockSpec((1, 1, 1, T, hd), lambda b, h, qi: (b, 1, h, 0, 0)),
                pl.BlockSpec((1, 1, 1, T, hd), lambda b, h, qi: (b, 2, h, 0, 0)),
            ],
            out_specs=pl.BlockSpec((1, 1, blk, hd),
                                   lambda b, h, qi: (b, h, qi, 0)),
            scratch_shapes=[
                pltpu.VMEM((blk, 1), jnp.float32),    # running max m
                pltpu.VMEM((blk, 1), jnp.float32),    # running sum l
                pltpu.VMEM((blk, hd), jnp.float32),   # output accumulator
            ],
        ),
        compiler_params=_compiler_params(("parallel", "parallel", "parallel")),
    )(qkv, qkv, qkv)


# ---------------------------------------------------------------------------
# Stage 3: y = concat_heads(attn) @ W_proj + b_proj, done as a per-head
#          accumulation (no in-kernel concatenate / relayout).
# ---------------------------------------------------------------------------
def _out_proj_kernel(y_ref, w_ref, b_ref, o_ref):
    nh = y_ref.shape[1]
    t_tile = y_ref.shape[2]
    C = w_ref.shape[2]
    acc = jnp.zeros((t_tile, C), jnp.float32)
    for h in range(nh):                              # static, unrolled
        acc = acc + jnp.dot(y_ref[0, h], w_ref[h],
                            preferred_element_type=jnp.float32)
    acc = acc + b_ref[0]
    o_ref[0] = acc.astype(o_ref.dtype)               # lane-dense (t_tile, C) store


def _out_projection(y_heads, w_proj_r, b_proj, t_tile, out_dtype):
    B, nh, T, hd = y_heads.shape
    C = nh * hd
    return pl.pallas_call(
        _out_proj_kernel,
        out_shape=jax.ShapeDtypeStruct((B, T, C), out_dtype),
        grid_spec=pltpu.PrefetchScalarGridSpec(
            num_scalar_prefetch=0,
            grid=(B, T // t_tile),
            in_specs=[
                pl.BlockSpec((1, nh, t_tile, hd), lambda b, ti: (b, 0, ti, 0)),
                pl.BlockSpec((nh, hd, C), lambda b, ti: (0, 0, 0)),
                pl.BlockSpec((1, C), lambda b, ti: (0, 0)),
            ],
            out_specs=pl.BlockSpec((1, t_tile, C), lambda b, ti: (b, ti, 0)),
        ),
        compiler_params=_compiler_params(("parallel", "parallel")),
    )(y_heads, w_proj_r, b_proj)


# ---------------------------------------------------------------------------
# Public entry point.
# ---------------------------------------------------------------------------
def causal_self_attention(x, w_qkv, b_qkv, w_proj, b_proj, n_head,
                          *, attn_tile=256, proj_tile=512,
                          compute_dtype=jnp.bfloat16):
    """x: (B, T, C); w_qkv: (C, 3C); b_qkv: (1, 3C); w_proj: (C, C); b_proj: (1, C)."""
    B, T, C = x.shape
    assert C % n_head == 0
    hd = C // n_head
    out_dtype = x.dtype
    blk = _pick_tile(T, attn_tile)
    t_tile = _pick_tile(T, proj_tile)

    # bf16 MXU operands (f32 accumulation stays inside the kernels); biases f32.
    xc = x.astype(compute_dtype)
    wq = w_qkv.astype(compute_dtype)
    wp = w_proj.astype(compute_dtype)
    bq = b_qkv.astype(jnp.float32)
    bp = b_proj.astype(jnp.float32)

    qkv = _qkv_projection(xc, wq, bq, n_head, t_tile)       # (B, 3, nh, T, hd)
    y_heads = _flash_attention(qkv, blk)                    # (B, nh, T, hd)
    wp_r = wp.reshape(n_head, hd, C)                        # per-head proj weight
    return _out_projection(y_heads, wp_r, bp, t_tile, out_dtype)


def reference_causal_self_attention(x, w_qkv, b_qkv, w_proj, b_proj, n_head):
    """Pure-JAX reference mirroring the PyTorch forward."""
    B, T, C = x.shape
    hd = C // n_head
    qkv = x @ w_qkv + b_qkv[0]                             # (B, T, 3C)
    q, k, v = jnp.split(qkv, 3, axis=2)
    q = q.reshape(B, T, n_head, hd).transpose(0, 2, 1, 3)  # (B, nh, T, hd)
    k = k.reshape(B, T, n_head, hd).transpose(0, 2, 1, 3)
    v = v.reshape(B, T, n_head, hd).transpose(0, 2, 1, 3)
    att = (q @ jnp.swapaxes(k, -1, -2)) / math.sqrt(hd)    # (B, nh, T, T)
    mask = jnp.tril(jnp.ones((T, T), dtype=bool))
    att = jnp.where(mask, att, -jnp.inf)
    att = jax.nn.softmax(att, axis=-1)
    y = att @ v                                            # (B, nh, T, hd)
    y = y.transpose(0, 2, 1, 3).reshape(B, T, C)
    return y @ w_proj + b_proj[0]


if __name__ == "__main__":
    # Small config consistent with the module: n_embd % n_head == 0.
    B, T, C, n_head = 2, 8, 32, 4

    key = jax.random.PRNGKey(0)
    kx, k1, k2, k3, k4 = jax.random.split(key, 5)

    # Deterministic parameter init (nn.Linear-style uniform(-1/sqrt(in), 1/sqrt(in))).
    bound = 1.0 / math.sqrt(C)
    w_qkv = jax.random.uniform(k1, (C, 3 * C), jnp.float32, -bound, bound)
    b_qkv = jax.random.uniform(k2, (1, 3 * C), jnp.float32, -bound, bound)
    w_proj = jax.random.uniform(k3, (C, C), jnp.float32, -bound, bound)
    b_proj = jax.random.uniform(k4, (1, C), jnp.float32, -bound, bound)

    x = jax.random.normal(kx, (B, T, C), jnp.float32)

    y = causal_self_attention(x, w_qkv, b_qkv, w_proj, b_proj, n_head)
    y = jax.block_until_ready(y)
    assert y.shape == (B, T, C)

    # Reference computed on the same bf16-quantized operands the kernels see;
    # tolerance covers bf16 intermediates + online-softmax reordering + approx
    # EUP reciprocal.
    xs = x.astype(jnp.bfloat16).astype(jnp.float32)
    wqs = w_qkv.astype(jnp.bfloat16).astype(jnp.float32)
    wps = w_proj.astype(jnp.bfloat16).astype(jnp.float32)
    y_ref = reference_causal_self_attention(xs, wqs, b_qkv, wps, b_proj, n_head)
    assert jnp.allclose(y, y_ref, rtol=3e-2, atol=3e-2), "mismatch vs JAX reference"

    print("KERNEL_OK")
</pallas_src>

<mosaic_0001>
module attributes {stable_mosaic.version = 11 : i64} {
  func.func @_qkv_proj_kernel(%arg0: i32, %arg1: i32, %arg2: memref<1x8x32xbf16, #tpu.memory_space<vmem>>, %arg3: memref<32x96xbf16, #tpu.memory_space<vmem>>, %arg4: memref<1x96xf32, #tpu.memory_space<vmem>>, %arg5: memref<1x3x4x8x8xbf16, #tpu.memory_space<vmem>>) attributes {dimension_semantics = [#tpu.dimension_semantics<parallel>, #tpu.dimension_semantics<parallel>], iteration_bounds = array<i64: 2, 1>, scalar_prefetch = 0 : i64, scratch_operands = 0 : i64, tpu.core_type = #tpu.core_type<tc>, window_params = [{transform_indices = @transform_0, window_bounds = array<i64: 1, 8, 32>}, {pipeline_mode = #tpu.pipeline_mode<synchronous>, transform_indices = @transform_1, window_bounds = array<i64: 32, 96>}, {pipeline_mode = #tpu.pipeline_mode<synchronous>, transform_indices = @transform_2, window_bounds = array<i64: 1, 96>}, {transform_indices = @transform_3, window_bounds = array<i64: 1, 3, 4, 8, 8>}]} {
    %c0 = arith.constant 0 : index
    %c0_0 = arith.constant 0 : index
    %c0_1 = arith.constant 0 : index
    %0 = vector.load %arg2[%c0, %c0_0, %c0_1] : memref<1x8x32xbf16, #tpu.memory_space<vmem>>, vector<1x8x32xbf16>
    %1 = vector.shape_cast %0 : vector<1x8x32xbf16> to vector<8x32xbf16>
    %c0_2 = arith.constant 0 : index
    %c0_3 = arith.constant 0 : index
    %2 = vector.load %arg3[%c0_2, %c0_3] : memref<32x96xbf16, #tpu.memory_space<vmem>>, vector<32x96xbf16>
    %c0_4 = arith.constant 0 : index
    %c0_5 = arith.constant 0 : index
    %3 = vector.load %arg4[%c0_4, %c0_5] : memref<1x96xf32, #tpu.memory_space<vmem>>, vector<1x96xf32>
    %4 = vector.shape_cast %3 : vector<1x96xf32> to vector<96xf32>
    %cst = arith.constant dense<0.000000e+00> : vector<8x96xf32>
    %5 = tpu.matmul %1, %2, %cst {dimension_numbers = #tpu.dot_dimension_numbers<[1], [0], [0], [1], [0, 0, 1, 1], [], []>} : vector<8x32xbf16>, vector<32x96xbf16>, vector<8x96xf32> -> vector<8x96xf32>
    %6 = vector.shape_cast %4 : vector<96xf32> to vector<1x96xf32>
    %7 = vector.broadcast %6 : vector<1x96xf32> to vector<8x96xf32>
    %8 = arith.addf %5, %7 : vector<8x96xf32>
    %9 = vector.extract_strided_slice %8 {offsets = [0, 0], sizes = [8, 8], strides = [1, 1]} : vector<8x96xf32> to vector<8x8xf32>
    %10 = arith.truncf %9 : vector<8x8xf32> to vector<8x8xbf16>
    %c0_6 = arith.constant 0 : index
    %c0_7 = arith.constant 0 : index
    %c0_8 = arith.constant 0 : index
    %c0_9 = arith.constant 0 : index
    %c0_10 = arith.constant 0 : index
    %11 = vector.load %arg5[%c0_6, %c0_7, %c0_8, %c0_9, %c0_10] : memref<1x3x4x8x8xbf16, #tpu.memory_space<vmem>>, vector<1x1x1x8x8xbf16>
    %12 = vector.shape_cast %11 : vector<1x1x1x8x8xbf16> to vector<8x8xbf16>
    %13 = vector.shape_cast %10 : vector<8x8xbf16> to vector<1x1x1x8x8xbf16>
    tpu.vector_store %arg5[%c0_6, %c0_7, %c0_8, %c0_9, %c0_10], %13 {strides = array<i32>} : memref<1x3x4x8x8xbf16, #tpu.memory_space<vmem>>, vector<1x1x1x8x8xbf16>,
    %14 = vector.extract_strided_slice %8 {offsets = [0, 8], sizes = [8, 8], strides = [1, 1]} : vector<8x96xf32> to vector<8x8xf32>
    %15 = arith.truncf %14 : vector<8x8xf32> to vector<8x8xbf16>
    %c0_11 = arith.constant 0 : index
    %c0_12 = arith.constant 0 : index
    %c1 = arith.constant 1 : index
    %c0_13 = arith.constant 0 : index
    %c0_14 = arith.constant 0 : index
    %16 = vector.load %arg5[%c0_11, %c0_12, %c1, %c0_13, %c0_14] : memref<1x3x4x8x8xbf16, #tpu.memory_space<vmem>>, vector<1x1x1x8x8xbf16>
    %17 = vector.shape_cast %16 : vector<1x1x1x8x8xbf16> to vector<8x8xbf16>
    %18 = vector.shape_cast %15 : vector<8x8xbf16> to vector<1x1x1x8x8xbf16>
    tpu.vector_store %arg5[%c0_11, %c0_12, %c1, %c0_13, %c0_14], %18 {strides = array<i32>} : memref<1x3x4x8x8xbf16, #tpu.memory_space<vmem>>, vector<1x1x1x8x8xbf16>,
    %19 = vector.extract_strided_slice %8 {offsets = [0, 16], sizes = [8, 8], strides = [1, 1]} : vector<8x96xf32> to vector<8x8xf32>
    %20 = arith.truncf %19 : vector<8x8xf32> to vector<8x8xbf16>
    %c0_15 = arith.constant 0 : index
    %c0_16 = arith.constant 0 : index
    %c2 = arith.constant 2 : index
    %c0_17 = arith.constant 0 : index
    %c0_18 = arith.constant 0 : index
    %21 = vector.load %arg5[%c0_15, %c0_16, %c2, %c0_17, %c0_18] : memref<1x3x4x8x8xbf16, #tpu.memory_space<vmem>>, vector<1x1x1x8x8xbf16>
    %22 = vector.shape_cast %21 : vector<1x1x1x8x8xbf16> to vector<8x8xbf16>
    %23 = vector.shape_cast %20 : vector<8x8xbf16> to vector<1x1x1x8x8xbf16>
    tpu.vector_store %arg5[%c0_15, %c0_16, %c2, %c0_17, %c0_18], %23 {strides = array<i32>} : memref<1x3x4x8x8xbf16, #tpu.memory_space<vmem>>, vector<1x1x1x8x8xbf16>,
    %24 = vector.extract_strided_slice %8 {offsets = [0, 24], sizes = [8, 8], strides = [1, 1]} : vector<8x96xf32> to vector<8x8xf32>
    %25 = arith.truncf %24 : vector<8x8xf32> to vector<8x8xbf16>
    %c0_19 = arith.constant 0 : index
    %c0_20 = arith.constant 0 : index
    %c3 = arith.constant 3 : index
    %c0_21 = arith.constant 0 : index
    %c0_22 = arith.constant 0 : index
    %26 = vector.load %arg5[%c0_19, %c0_20, %c3, %c0_21, %c0_22] : memref<1x3x4x8x8xbf16, #tpu.memory_space<vmem>>, vector<1x1x1x8x8xbf16>
    %27 = vector.shape_cast %26 : vector<1x1x1x8x8xbf16> to vector<8x8xbf16>
    %28 = vector.shape_cast %25 : vector<8x8xbf16> to vector<1x1x1x8x8xbf16>
    tpu.vector_store %arg5[%c0_19, %c0_20, %c3, %c0_21, %c0_22], %28 {strides = array<i32>} : memref<1x3x4x8x8xbf16, #tpu.memory_space<vmem>>, vector<1x1x1x8x8xbf16>,
    %29 = vector.extract_strided_slice %8 {offsets = [0, 32], sizes = [8, 8], strides = [1, 1]} : vector<8x96xf32> to vector<8x8xf32>
    %30 = arith.truncf %29 : vector<8x8xf32> to vector<8x8xbf16>
    %c0_23 = arith.constant 0 : index
    %c1_24 = arith.constant 1 : index
    %c0_25 = arith.constant 0 : index
    %c0_26 = arith.constant 0 : index
    %c0_27 = arith.constant 0 : index
    %31 = vector.load %arg5[%c0_23, %c1_24, %c0_25, %c0_26, %c0_27] : memref<1x3x4x8x8xbf16, #tpu.memory_space<vmem>>, vector<1x1x1x8x8xbf16>
    %32 = vector.shape_cast %31 : vector<1x1x1x8x8xbf16> to vector<8x8xbf16>
    %33 = vector.shape_cast %30 : vector<8x8xbf16> to vector<1x1x1x8x8xbf16>
    tpu.vector_store %arg5[%c0_23, %c1_24, %c0_25, %c0_26, %c0_27], %33 {strides = array<i32>} : memref<1x3x4x8x8xbf16, #tpu.memory_space<vmem>>, vector<1x1x1x8x8xbf16>,
    %34 = vector.extract_strided_slice %8 {offsets = [0, 40], sizes = [8, 8], strides = [1, 1]} : vector<8x96xf32> to vector<8x8xf32>
    %35 = arith.truncf %34 : vector<8x8xf32> to vector<8x8xbf16>
    %c0_28 = arith.constant 0 : index
    %c1_29 = arith.constant 1 : index
    %c1_30 = arith.constant 1 : index
    %c0_31 = arith.constant 0 : index
    %c0_32 = arith.constant 0 : index
    %36 = vector.load %arg5[%c0_28, %c1_29, %c1_30, %c0_31, %c0_32] : memref<1x3x4x8x8xbf16, #tpu.memory_space<vmem>>, vector<1x1x1x8x8xbf16>
    %37 = vector.shape_cast %36 : vector<1x1x1x8x8xbf16> to vector<8x8xbf16>
    %38 = vector.shape_cast %35 : vector<8x8xbf16> to vector<1x1x1x8x8xbf16>
    tpu.vector_store %arg5[%c0_28, %c1_29, %c1_30, %c0_31, %c0_32], %38 {strides = array<i32>} : memref<1x3x4x8x8xbf16, #tpu.memory_space<vmem>>, vector<1x1x1x8x8xbf16>,
    %39 = vector.extract_strided_slice %8 {offsets = [0, 48], sizes = [8, 8], strides = [1, 1]} : vector<8x96xf32> to vector<8x8xf32>
    %40 = arith.truncf %39 : vector<8x8xf32> to vector<8x8xbf16>
    %c0_33 = arith.constant 0 : index
    %c1_34 = arith.constant 1 : index
    %c2_35 = arith.constant 2 : index
    %c0_36 = arith.constant 0 : index
    %c0_37 = arith.constant 0 : index
    %41 = vector.load %arg5[%c0_33, %c1_34, %c2_35, %c0_36, %c0_37] : memref<1x3x4x8x8xbf16, #tpu.memory_space<vmem>>, vector<1x1x1x8x8xbf16>
    %42 = vector.shape_cast %41 : vector<1x1x1x8x8xbf16> to vector<8x8xbf16>
    %43 = vector.shape_cast %40 : vector<8x8xbf16> to vector<1x1x1x8x8xbf16>
    tpu.vector_store %arg5[%c0_33, %c1_34, %c2_35, %c0_36, %c0_37], %43 {strides = array<i32>} : memref<1x3x4x8x8xbf16, #tpu.memory_space<vmem>>, vector<1x1x1x8x8xbf16>,
    %44 = vector.extract_strided_slice %8 {offsets = [0, 56], sizes = [8, 8], strides = [1, 1]} : vector<8x96xf32> to vector<8x8xf32>
    %45 = arith.truncf %44 : vector<8x8xf32> to vector<8x8xbf16>
    %c0_38 = arith.constant 0 : index
    %c1_39 = arith.constant 1 : index
    %c3_40 = arith.constant 3 : index
    %c0_41 = arith.constant 0 : index
    %c0_42 = arith.constant 0 : index
    %46 = vector.load %arg5[%c0_38, %c1_39, %c3_40, %c0_41, %c0_42] : memref<1x3x4x8x8xbf16, #tpu.memory_space<vmem>>, vector<1x1x1x8x8xbf16>
    %47 = vector.shape_cast %46 : vector<1x1x1x8x8xbf16> to vector<8x8xbf16>
    %48 = vector.shape_cast %45 : vector<8x8xbf16> to vector<1x1x1x8x8xbf16>
    tpu.vector_store %arg5[%c0_38, %c1_39, %c3_40, %c0_41, %c0_42], %48 {strides = array<i32>} : memref<1x3x4x8x8xbf16, #tpu.memory_space<vmem>>, vector<1x1x1x8x8xbf16>,
    %49 = vector.extract_strided_slice %8 {offsets = [0, 64], sizes = [8, 8], strides = [1, 1]} : vector<8x96xf32> to vector<8x8xf32>
    %50 = arith.truncf %49 : vector<8x8xf32> to vector<8x8xbf16>
    %c0_43 = arith.constant 0 : index
    %c2_44 = arith.constant 2 : index
    %c0_45 = arith.constant 0 : index
    %c0_46 = arith.constant 0 : index
    %c0_47 = arith.constant 0 : index
    %51 = vector.load %arg5[%c0_43, %c2_44, %c0_45, %c0_46, %c0_47] : memref<1x3x4x8x8xbf16, #tpu.memory_space<vmem>>, vector<1x1x1x8x8xbf16>
    %52 = vector.shape_cast %51 : vector<1x1x1x8x8xbf16> to vector<8x8xbf16>
    %53 = vector.shape_cast %50 : vector<8x8xbf16> to vector<1x1x1x8x8xbf16>
    tpu.vector_store %arg5[%c0_43, %c2_44, %c0_45, %c0_46, %c0_47], %53 {strides = array<i32>} : memref<1x3x4x8x8xbf16, #tpu.memory_space<vmem>>, vector<1x1x1x8x8xbf16>,
    %54 = vector.extract_strided_slice %8 {offsets = [0, 72], sizes = [8, 8], strides = [1, 1]} : vector<8x96xf32> to vector<8x8xf32>
    %55 = arith.truncf %54 : vector<8x8xf32> to vector<8x8xbf16>
    %c0_48 = arith.constant 0 : index
    %c2_49 = arith.constant 2 : index
    %c1_50 = arith.constant 1 : index
    %c0_51 = arith.constant 0 : index
    %c0_52 = arith.constant 0 : index
    %56 = vector.load %arg5[%c0_48, %c2_49, %c1_50, %c0_51, %c0_52] : memref<1x3x4x8x8xbf16, #tpu.memory_space<vmem>>, vector<1x1x1x8x8xbf16>
    %57 = vector.shape_cast %56 : vector<1x1x1x8x8xbf16> to vector<8x8xbf16>
    %58 = vector.shape_cast %55 : vector<8x8xbf16> to vector<1x1x1x8x8xbf16>
    tpu.vector_store %arg5[%c0_48, %c2_49, %c1_50, %c0_51, %c0_52], %58 {strides = array<i32>} : memref<1x3x4x8x8xbf16, #tpu.memory_space<vmem>>, vector<1x1x1x8x8xbf16>,
    %59 = vector.extract_strided_slice %8 {offsets = [0, 80], sizes = [8, 8], strides = [1, 1]} : vector<8x96xf32> to vector<8x8xf32>
    %60 = arith.truncf %59 : vector<8x8xf32> to vector<8x8xbf16>
    %c0_53 = arith.constant 0 : index
    %c2_54 = arith.constant 2 : index
    %c2_55 = arith.constant 2 : index
    %c0_56 = arith.constant 0 : index
    %c0_57 = arith.constant 0 : index
    %61 = vector.load %arg5[%c0_53, %c2_54, %c2_55, %c0_56, %c0_57] : memref<1x3x4x8x8xbf16, #tpu.memory_space<vmem>>, vector<1x1x1x8x8xbf16>
    %62 = vector.shape_cast %61 : vector<1x1x1x8x8xbf16> to vector<8x8xbf16>
    %63 = vector.shape_cast %60 : vector<8x8xbf16> to vector<1x1x1x8x8xbf16>
    tpu.vector_store %arg5[%c0_53, %c2_54, %c2_55, %c0_56, %c0_57], %63 {strides = array<i32>} : memref<1x3x4x8x8xbf16, #tpu.memory_space<vmem>>, vector<1x1x1x8x8xbf16>,
    %64 = vector.extract_strided_slice %8 {offsets = [0, 88], sizes = [8, 8], strides = [1, 1]} : vector<8x96xf32> to vector<8x8xf32>
    %65 = arith.truncf %64 : vector<8x8xf32> to vector<8x8xbf16>
    %c0_58 = arith.constant 0 : index
    %c2_59 = arith.constant 2 : index
    %c3_60 = arith.constant 3 : index
    %c0_61 = arith.constant 0 : index
    %c0_62 = arith.constant 0 : index
    %66 = vector.load %arg5[%c0_58, %c2_59, %c3_60, %c0_61, %c0_62] : memref<1x3x4x8x8xbf16, #tpu.memory_space<vmem>>, vector<1x1x1x8x8xbf16>
    %67 = vector.shape_cast %66 : vector<1x1x1x8x8xbf16> to vector<8x8xbf16>
    %68 = vector.shape_cast %65 : vector<8x8xbf16> to vector<1x1x1x8x8xbf16>
    tpu.vector_store %arg5[%c0_58, %c2_59, %c3_60, %c0_61, %c0_62], %68 {strides = array<i32>} : memref<1x3x4x8x8xbf16, #tpu.memory_space<vmem>>, vector<1x1x1x8x8xbf16>,
    return
  }
  func.func @transform_0(%arg0: i32, %arg1: i32) -> (i32, i32, i32) {
    %c0_i32 = arith.constant 0 : i32
    %c0_i32_0 = arith.constant 0 : i32
    return %arg0, %arg1, %c0_i32 : i32, i32, i32
  }
  func.func @transform_1(%arg0: i32, %arg1: i32) -> (i32, i32) {
    %c0_i32 = arith.constant 0 : i32
    %c0_i32_0 = arith.constant 0 : i32
    %c0_i32_1 = arith.constant 0 : i32
    return %c0_i32, %c0_i32_0 : i32, i32
  }
  func.func @transform_2(%arg0: i32, %arg1: i32) -> (i32, i32) {
    %c0_i32 = arith.constant 0 : i32
    %c0_i32_0 = arith.constant 0 : i32
    %c0_i32_1 = arith.constant 0 : i32
    return %c0_i32, %c0_i32_0 : i32, i32
  }
  func.func @transform_3(%arg0: i32, %arg1: i32) -> (i32, i32, i32, i32, i32) {
    %c0_i32 = arith.constant 0 : i32
    %c0_i32_0 = arith.constant 0 : i32
    %c0_i32_1 = arith.constant 0 : i32
    %c0_i32_2 = arith.constant 0 : i32
    return %arg0, %c0_i32, %c0_i32_0, %arg1, %c0_i32_1 : i32, i32, i32, i32, i32
  }
}

</mosaic_0001>

<llo_original>
// kernel: tpu_custom_call.1
$region0: #{tpu_custom_call.1}
  #allocation0 [shape = 'u32[]', space=smem, size = 0x4, offset = 0x4, fixed_abs, tag = 'smem constant byte address 0x4 - core index']
  #allocation1 [shape = 'u32[144,128]{1,0:T(1,128)}', space=vmem, size = 0x12000, scoped, tag = 'internal scratch']
  %s0 = inlined_call_operand.hbm [shape: bf16[2,8,32], index: 0, kind: input, shape index: {}]
  %s1 = inlined_call_operand.hbm [shape: bf16[32,96], index: 1, kind: input, shape index: {}]
  %s2 = inlined_call_operand.vmem [shape: f32[1,96], index: 2, kind: input, shape index: {}]
  %s3 = inlined_call_operand.hbm [shape: bf16[2,3,4,8,8], index: 3, kind: output, shape index: {}]
  %s4 = sld [smem:[#allocation0]]
  $region53: #{tpu_custom_call.1} parent=0
    _
  %s6 = ssub.s32 1, %s4
  %s7 = scalar_select 0, %s6, %s4
  $region1: #{tpu_custom_call.1} parent=0
    #allocation2 [shape = 'u8[4096]{0}', space=vmem, size = 0x1000, scoped, tag = 'input window, operand 0']
    #allocation3 [shape = 's32[2]{0}', space=sflag, size = 0x8, scoped, tag = 'scoped memory for tpu_custom_call.1']
    #allocation4 [shape = 's32[2]{0}', space=sflag, size = 0x8, scoped, tag = 'scoped memory for tpu_custom_call.1']
    #allocation5 [shape = 'u8[8192]{0}', space=vmem, size = 0x2000, scoped, tag = 'input window, operand 1, single buffered']
    #allocation6 [shape = 's32[1]{0}', space=sflag, size = 0x4, scoped, tag = 'scoped memory for tpu_custom_call.1']
    #allocation7 [shape = 'u8[49152]{0}', space=vmem, size = 0xc000, scoped, tag = 'output window, operand 0']
    %8 = vsyncpa [#allocation3], 0
    %s9 = scalar_lea.sflag [#allocation3], 1
    %10 = vsyncpa %s9, 0
    %11 = vsyncpa [#allocation6], 0
    %12 = vsyncpa [#allocation4], 0
    %s13 = scalar_lea.sflag [#allocation4], 1
    %14 = vsyncpa %s13, 0
    loop: start=0, step=1, limit=4
    $region2: #{tpu_custom_call.1} parent=1 // loop_pre_header
      _
    $region3: #{tpu_custom_call.1} parent=1 // loop_header
      %s16 = sphi 0, %s20
      %p17 = scmp.ge.s32.totalorder %s16, 4
      %s23 = sphi 0, %s35
      %s24 = sphi 0, %s31
      %s25 = sphi 0, %s23
      %s26 = sphi 0, %s24
      %s27 = sphi 0, %s25
      %s28 = sphi 0, %s26
      %s40 = sphi 0, %s42
      %s43 = sphi 0, %s40
      %s44 = sphi 0, %s43
      %s60 = sphi 0, %s44
      %s64 = sphi 0, %s64
      %s66 = sphi 0, %s64
      %s67 = sphi 0, %s66
      %s81 = sphi 0, %s67
      %s85 = sphi 0, %s85
      %s87 = sphi 0, %s85
      %s88 = sphi 0, %s87
      %s102 = sphi 0, %s88
      %s110 = sphi 0, %s112
      %s113 = sphi 0, %s110
      %s114 = sphi 0, %s113
      %s130 = sphi 0, %s114
    $region4: #{tpu_custom_call.1} parent=1 // loop_header_branch
      %19 = sbr.rel (%p17) target = $region8
    $region5: #{tpu_custom_call.1} parent=1 // loop_body
      %s21 = ssub.s32 %s16, 1
      %s22 = ssub.s32 %s16, 2
      %s29 = sadd.s32 1, %s24
      %p30 = scmp.ge.s32.totalorder %s29, 1
      %s31 = scalar_select %p30, 0, %s29
      %s32 = sadd.s32 1, %s23
      %s33 = scalar_select %p30, %s32, %s23
      %p34 = scmp.ge.s32.totalorder %s33, 2
      %s35 = scalar_select %p34, 0, %s33
      %s36 = ssub.s32 %s23, %s35
      %s37 = ssub.s32 %s24, %s31
      %s38 = sor.u32 %s36, %s37
      %p39 = scmp.eq.s32.totalorder %s38, 0
      %s41 = sadd.s32 %s40, 1
      %s42 = scalar_select %p39, %s40, %s41
      %p45 = pneg %p39
      %p46 = scmp.eq.s32.totalorder %s16, 1
      %p47 = por %p45, %p46
      %p48 = scmp.ne.s32.totalorder %s40, %s43
      %p49 = scmp.eq.s32.totalorder %s16, 0
      %p50 = por %p48, %p49
      %p51 = scmp.ne.s32.totalorder %s40, %s43
      %p52 = scmp.eq.s32.totalorder %s21, 1
      %p53 = por %p51, %p52
      %p54 = scmp.ne.s32.totalorder %s43, %s44
      %p55 = scmp.eq.s32.totalorder %s21, 0
      %p56 = por %p54, %p55
      %p57 = scmp.ne.s32.totalorder %s43, %s44
      %p58 = scmp.eq.s32.totalorder %s22, 1
      %p59 = por %p57, %p58
      %p61 = scmp.ne.s32.totalorder %s44, %s60
      %p62 = scmp.eq.s32.totalorder %s22, 0
      %p63 = por %p61, %p62
      %s65 = sadd.s32 %s64, 1
      %p68 = scmp.eq.s32.totalorder %s16, 1
      %p69 = scmp.ne.s32.totalorder %s64, %s66
      %p70 = scmp.eq.s32.totalorder %s16, 0
      %p71 = por %p69, %p70
      %p72 = scmp.ne.s32.totalorder %s64, %s66
      %p73 = scmp.eq.s32.totalorder %s21, 1
      %p74 = por %p72, %p73
      %p75 = scmp.ne.s32.totalorder %s66, %s67
      %p76 = scmp.eq.s32.totalorder %s21, 0
      %p77 = por %p75, %p76
      %p78 = scmp.ne.s32.totalorder %s66, %s67
      %p79 = scmp.eq.s32.totalorder %s22, 1
      %p80 = por %p78, %p79
      %p82 = scmp.ne.s32.totalorder %s67, %s81
      %p83 = scmp.eq.s32.totalorder %s22, 0
      %p84 = por %p82, %p83
      %s86 = sadd.s32 %s85, 1
      %p89 = scmp.eq.s32.totalorder %s16, 1
      %p90 = scmp.ne.s32.totalorder %s85, %s87
      %p91 = scmp.eq.s32.totalorder %s16, 0
      %p92 = por %p90, %p91
      %p93 = scmp.ne.s32.totalorder %s85, %s87
      %p94 = scmp.eq.s32.totalorder %s21, 1
      %p95 = por %p93, %p94
      %p96 = scmp.ne.s32.totalorder %s87, %s88
      %p97 = scmp.eq.s32.totalorder %s21, 0
      %p98 = por %p96, %p97
      %p99 = scmp.ne.s32.totalorder %s87, %s88
      %p100 = scmp.eq.s32.totalorder %s22, 1
      %p101 = por %p99, %p100
      %p103 = scmp.ne.s32.totalorder %s88, %s102
      %p104 = scmp.eq.s32.totalorder %s22, 0
      %p105 = por %p103, %p104
      %s106 = ssub.s32 %s23, %s35
      %s107 = ssub.s32 %s24, %s31
      %s108 = sor.u32 %s106, %s107
      %p109 = scmp.eq.s32.totalorder %s108, 0
      %s111 = sadd.s32 %s110, 1
      %s112 = scalar_select %p109, %s110, %s111
      %p115 = pneg %p109
      %p116 = scmp.eq.s32.totalorder %s16, 1
      %p117 = por %p115, %p116
      %p118 = scmp.ne.s32.totalorder %s110, %s113
      %p119 = scmp.eq.s32.totalorder %s16, 0
      %p120 = por %p118, %p119
      %p121 = scmp.ne.s32.totalorder %s110, %s113
      %p122 = scmp.eq.s32.totalorder %s21, 1
      %p123 = por %p121, %p122
      %p124 = scmp.ne.s32.totalorder %s113, %s114
      %p125 = scmp.eq.s32.totalorder %s21, 0
      %p126 = por %p124, %p125
      %p127 = scmp.ne.s32.totalorder %s113, %s114
      %p128 = scmp.eq.s32.totalorder %s22, 1
      %p129 = por %p127, %p128
      %p131 = scmp.ne.s32.totalorder %s114, %s130
      %p132 = scmp.eq.s32.totalorder %s22, 0
      %p133 = por %p131, %p132
      %p134 = scmp.le.s32.totalorder 1, %s16
      %p135 = scmp.lt.s32.totalorder %s16, 3
      %p136 = pnand %p134, %p135
      %p137 = pneg %p136
      // Predicated region
      $region9: #{tpu_custom_call.1} parent=5 // pred_check
        _
      $region10: #{tpu_custom_call.1} parent=5 // pred_check_branch
        %139 = sbr.rel (%p136) target = $region12
      $region11: #{tpu_custom_call.1} parent=5 // pred_region
        %s140 = ssub.s32 %s16, 1
        // Predicated region
        $region13: #{tpu_custom_call.1} parent=11 // pred_check
          %p141 = pneg %p77
        $region14: #{tpu_custom_call.1} parent=11 // pred_check_branch
          %143 = sbr.rel (%p141) target = $region16
        $region15: #{tpu_custom_call.1} parent=11 // pred_region
          %s145 = ssub.s32 256, 256
          %146 = vsyncadd [#allocation6], %s145
          %s147 = sshll.u32 [#allocation5], 4
          %s148 = int_to_ptr.vmem [resolvable:$true] %s147
          %153 = dma.hbm_to_vmem [thread:$0]  %s1, 256, %s148, [#allocation6], 64, 64, 4
        $region16: #{tpu_custom_call.1} parent=11 // pred_fallthru
          _
        // Predicated region
        $region17: #{tpu_custom_call.1} parent=11 // pred_check
          %p154 = pneg %p98
        $region18: #{tpu_custom_call.1} parent=11 // pred_check_branch
          %156 = sbr.rel (%p154) target = $region20
        $region19: #{tpu_custom_call.1} parent=11 // pred_region
          _
        $region20: #{tpu_custom_call.1} parent=11 // pred_fallthru
          _
      $region12: #{tpu_custom_call.1} parent=5 // pred_fallthru
        _
      %p157 = scmp.lt.s32.totalorder %s16, 2
      // Predicated region
      $region21: #{tpu_custom_call.1} parent=5 // pred_check
        %p158 = pneg %p157
      $region22: #{tpu_custom_call.1} parent=5 // pred_check_branch
        %160 = sbr.rel (%p158) target = $region24
      $region23: #{tpu_custom_call.1} parent=5 // pred_region
        // Predicated region
        $region25: #{tpu_custom_call.1} parent=23 // pred_check
          %p161 = pneg %p50
        $region26: #{tpu_custom_call.1} parent=23 // pred_check_branch
          %163 = sbr.rel (%p161) target = $region28
        $region27: #{tpu_custom_call.1} parent=23 // pred_region
          %s164 = sand.u32 %s40, 1
          %s165 = scalar_lea.sflag [#allocation3], %s164
          %s166 = sand.u32 %s40, 1
          %s167 = smul.addr %s166, 4
          %s168 = scalar_lea.vmem [#allocation2], %s167
          %s170 = ssub.s32 64, 64
          %171 = vsyncadd %s165, %s170
          %s172 = sadd.s32 %s24, %s23
          %s173 = smul.addr %s172, 64
          %s174 = scalar_lea.hbm %s0, %s173
          %s176 = sshll.u32 %s168, 4
          %s177 = int_to_ptr.vmem [resolvable:$true] %s176
          %179 = dma.hbm_to_vmem [thread:$0]  %s174, 64, %s177, %s165
        $region28: #{tpu_custom_call.1} parent=23 // pred_fallthru
          _
      $region24: #{tpu_custom_call.1} parent=5 // pred_fallthru
        _
      %p180 = scmp.le.s32.totalorder 1, %s16
      %p181 = scmp.lt.s32.totalorder %s16, 3
      %p182 = pnand %p180, %p181
      %p183 = pneg %p182
      // Predicated region
      $region29: #{tpu_custom_call.1} parent=5 // pred_check
        _
      $region30: #{tpu_custom_call.1} parent=5 // pred_check_branch
        %185 = sbr.rel (%p182) target = $region32
      $region31: #{tpu_custom_call.1} parent=5 // pred_region
        %s186 = ssub.s32 %s16, 1
        %s187 = sand.u32 %s43, 1
        %s188 = scalar_lea.sflag [#allocation3], %s187
        %s189 = sand.u32 %s43, 1
        %s190 = smul.addr %s189, 4
        %s191 = scalar_lea.vmem [#allocation2], %s190
        // Predicated region
        $region33: #{tpu_custom_call.1} parent=31 // pred_check
          %p192 = pneg %p56
        $region34: #{tpu_custom_call.1} parent=31 // pred_check_branch
          %194 = sbr.rel (%p192) target = $region36
        $region35: #{tpu_custom_call.1} parent=31 // pred_region
          %195 = dma.done %s188, 64
        $region36: #{tpu_custom_call.1} parent=31 // pred_fallthru
          _
        // Predicated region
        $region37: #{tpu_custom_call.1} parent=31 // pred_check
          %p196 = pneg %p77
        $region38: #{tpu_custom_call.1} parent=31 // pred_check_branch
          %198 = sbr.rel (%p196) target = $region40
        $region39: #{tpu_custom_call.1} parent=31 // pred_region
          %199 = dma.done [#allocation6], 256
        $region40: #{tpu_custom_call.1} parent=31 // pred_fallthru
          _
        %s200 = sand.u32 %s43, 1
        %s201 = scalar_lea.sflag [#allocation3], %s200
        %s202 = sand.u32 %s43, 1
        %s203 = smul.addr %s202, 4
        %s204 = scalar_lea.vmem [#allocation2], %s203
        %p205 = pneg %p56
        %p206 = pneg %p53
        %p207 = pneg %p77
        %p208 = pneg %p74
        %p209 = pneg %p98
        %p210 = pneg %p95
        %p211 = pneg %p126
        %p212 = pneg %p123
        %s213 = sand.u32 %s113, 1
        %s214 = scalar_lea.sflag [#allocation4], %s213
        %s215 = sand.u32 %s113, 1
        %s216 = smul.addr %s215, 48
        %s217 = scalar_lea.vmem [#allocation7], %s216
        %v219 = vld [vmem:[%s191] sm:$0xf]
        %v220 = vld [vmem:[#allocation5] sm:$0xf]
        %v221 = vld [vmem:[#allocation5 + $0x4] sm:$0xf]
        %v222 = vld [vmem:[#allocation5 + $0x8] sm:$0xf]
        %v223 = vld [vmem:[#allocation5 + $0xc] sm:$0xf]
        %v224 = vld [vmem:[%s2] sm:$0x1]
        %v226 = vlaneseq
        %v227 = vshrl.u32 %v226, 7
        %v228 = vsub.s32 0, %v227
        %v229 = vrot.slane %v224, %v228
        %v235 = vunpack.c.l.b16 %v220
        %v236 = vunpack.c.l.b16 %v221
        %v237 = vunpack.c.l.b16 %v222
        %v238 = vunpack.c.l.b16 %v223
        %v239 = vpack.c.b16 %v236, %v235
        %v240 = vpack.c.b16 %v238, %v237
        %vm243 = vcmask 261120
        %v245 = vsel %vm243, %v219, 0
        %247 = vmatprep.subr.bf16.mxu0 0
        %248 = vmatpush1.bf16.msra.mxu0 %v239
        %249 = vmatprep.subr.bf16.mxu0 0
        %250 = vmatpush1.bf16.msra.mxu0 %v240
        %251 = vmatprep.subr.bf16.mxu0 0
        %252 = vmatpush1.bf16.msra.mxu0 0
        %253 = vmatprep.subr.bf16.mxu0 0
        %254 = vmatpush1.bf16.msra.mxu0 0
        %255 = vmatprep.subr.bf16.mxu0 0
        %256 = vmatpush1.bf16.msra.mxu0 0
        %257 = vmatprep.subr.bf16.mxu0 0
        %258 = vmatpush1.bf16.msra.mxu0 0
        %259 = vmatprep.subr.bf16.mxu0 0
        %260 = vmatpush1.bf16.msra.mxu0 0
        %261 = vmatprep.subr.bf16.mxu0 0
        %262 = vmatpush1.bf16.msra.mxu0 0
        %263 = vmatprep.subr.bf16.mxu0 0
        %264 = vmatpush1.bf16.msra.mxu0 0
        %265 = vmatprep.subr.bf16.mxu0 0
        %266 = vmatpush1.bf16.msra.mxu0 0
        %267 = vmatprep.subr.bf16.mxu0 0
        %268 = vmatpush1.bf16.msra.mxu0 0
        %269 = vmatprep.subr.bf16.mxu0 0
        %270 = vmatpush1.bf16.msra.mxu0 0
        %271 = vmatprep.subr.bf16.mxu0 0
        %272 = vmatpush1.bf16.msra.mxu0 0
        %273 = vmatprep.subr.bf16.mxu0 0
        %274 = vmatpush1.bf16.msra.mxu0 0
        %275 = vmatprep.subr.bf16.mxu0 0
        %276 = vmatpush1.bf16.msra.mxu0 0
        %277 = vmatprep.subr.bf16.mxu0 0
        %278 = vmatpush1.bf16.msra.mxu0 0
        %279 = vmatprep.mubr.bf16.mxu0 0
        %280 = vmatmul.mubr.bf16.gmra.mrb[0].mxu0 %v245
        %v281 = vpop.f32.mrb[0].mxu0
        %v282 = vadd.f32 %v229, %v281
        %v283 = vpop.f32.mrb[0].mxu0
        %v284 = vpop.f32.mrb[0].mxu0
        %v285 = vpop.f32.mrb[0].mxu0
        %286 = vdwg.mxu0
        %v287 = vpack.c.bf16 %v282, %v282
        %vm288 = vcmask 60416
        %289 = vst.msk [vmem:[%s217] sm:$0xf] %vm288, %v287
        %v291 = vunpack.c.l.b16 %v287
        %v292 = vpack.c.b16 %v291, %v291
        %293 = vrot.lane.b32.xlu0 %v292, 120
        %v294 = vpop.permute.xlu0 %293
        %s296 = scalar_lea.vmem %s217, 4 [#allocation7]
        %297 = vst.msk [vmem:[%s296] sm:$0xf] %vm288, %v294
        %298 = vrot.lane.b32.xlu0 %v292, 112
        %v299 = vpop.permute.xlu0 %298
        %s301 = scalar_lea.vmem %s217, 8 [#allocation7]
        %302 = vst.msk [vmem:[%s301] sm:$0xf] %vm288, %v299
        %303 = vrot.lane.b32.xlu0 %v292, 104
        %v304 = vpop.permute.xlu0 %303
        %s306 = scalar_lea.vmem %s217, 12 [#allocation7]
        %307 = vst.msk [vmem:[%s306] sm:$0xf] %vm288, %v304
        %308 = vrot.lane.b32.xlu0 %v292, 96
        %v309 = vpop.permute.xlu0 %308
        %s311 = scalar_lea.vmem %s217, 16 [#allocation7]
        %312 = vst.msk [vmem:[%s311] sm:$0xf] %vm288, %v309
        %313 = vrot.lane.b32.xlu0 %v292, 88
        %v314 = vpop.permute.xlu0 %313
        %s316 = scalar_lea.vmem %s217, 20 [#allocation7]
        %317 = vst.msk [vmem:[%s316] sm:$0xf] %vm288, %v314
        %318 = vrot.lane.b32.xlu0 %v292, 80
        %v319 = vpop.permute.xlu0 %318
        %s321 = scalar_lea.vmem %s217, 24 [#allocation7]
        %322 = vst.msk [vmem:[%s321] sm:$0xf] %vm288, %v319
        %323 = vrot.lane.b32.xlu0 %v292, 72
        %v324 = vpop.permute.xlu0 %323
        %s326 = scalar_lea.vmem %s217, 28 [#allocation7]
        %327 = vst.msk [vmem:[%s326] sm:$0xf] %vm288, %v324
        %328 = vrot.lane.b32.xlu0 %v292, 64
        %v329 = vpop.permute.xlu0 %328
        %s331 = scalar_lea.vmem %s217, 32 [#allocation7]
        %332 = vst.msk [vmem:[%s331] sm:$0xf] %vm288, %v329
        %333 = vrot.lane.b32.xlu0 %v292, 56
        %v334 = vpop.permute.xlu0 %333
        %s336 = scalar_lea.vmem %s217, 36 [#allocation7]
        %337 = vst.msk [vmem:[%s336] sm:$0xf] %vm288, %v334
        %338 = vrot.lane.b32.xlu0 %v292, 48
        %v339 = vpop.permute.xlu0 %338
        %s341 = scalar_lea.vmem %s217, 40 [#allocation7]
        %342 = vst.msk [vmem:[%s341] sm:$0xf] %vm288, %v339
        %343 = vrot.lane.b32.xlu0 %v292, 40
        %v344 = vpop.permute.xlu0 %343
        %s346 = scalar_lea.vmem %s217, 44 [#allocation7]
        %347 = vst.msk [vmem:[%s346] sm:$0xf] %vm288, %v344
        %s348 = sand.u32 %s113, 1
        %s349 = scalar_lea.sflag [#allocation4], %s348
        %s350 = sand.u32 %s113, 1
        %s351 = smul.addr %s350, 48
        %s352 = scalar_lea.vmem [#allocation7], %s351
        // Predicated region
        $region41: #{tpu_custom_call.1} parent=31 // pred_check
          %p353 = pneg %p123
        $region42: #{tpu_custom_call.1} parent=31 // pred_check_branch
          %355 = sbr.rel (%p353) target = $region44
        $region43: #{tpu_custom_call.1} parent=31 // pred_region
          %s357 = ssub.s32 768, 768
          %358 = vsyncadd %s349, %s357
          %s359 = smul.addr %s25, 12
          %s360 = sadd.s32 %s26, %s359
          %s361 = smul.addr %s360, 64
          %s362 = scalar_lea.hbm %s3, %s361
          %s363 = sshll.u32 %s352, 4
          %s364 = int_to_ptr.vmem [resolvable:$true] %s363
          %369 = dma.vmem_to_hbm [thread:$0]  %s364, 768, %s362, %s349, 64, 64, 4
        $region44: #{tpu_custom_call.1} parent=31 // pred_fallthru
          _
      $region32: #{tpu_custom_call.1} parent=5 // pred_fallthru
        _
      %p370 = scmp.le.s32.totalorder 2, %s16
      // Predicated region
      $region45: #{tpu_custom_call.1} parent=5 // pred_check
        %p371 = pneg %p370
      $region46: #{tpu_custom_call.1} parent=5 // pred_check_branch
        %373 = sbr.rel (%p371) target = $region48
      $region47: #{tpu_custom_call.1} parent=5 // pred_region
        %s374 = ssub.s32 %s16, 2
        // Predicated region
        $region49: #{tpu_custom_call.1} parent=47 // pred_check
          %p375 = pneg %p129
        $region50: #{tpu_custom_call.1} parent=47 // pred_check_branch
          %377 = sbr.rel (%p375) target = $region52
        $region51: #{tpu_custom_call.1} parent=47 // pred_region
          %s378 = sand.u32 %s114, 1
          %s379 = scalar_lea.sflag [#allocation4], %s378
          %s380 = sand.u32 %s114, 1
          %s381 = smul.addr %s380, 48
          %s382 = scalar_lea.vmem [#allocation7], %s381
          %383 = dma.done %s379, 768
        $region52: #{tpu_custom_call.1} parent=47 // pred_fallthru
          _
      $region48: #{tpu_custom_call.1} parent=5 // pred_fallthru
        _
    $region6: #{tpu_custom_call.1} parent=1 // loop_footer
      %s20 = sadd.s32 1, %s16
    $region7: #{tpu_custom_call.1} parent=1 // loop_footer_branch
      %15 = sbr.rel target = $region3
    $region8: #{tpu_custom_call.1} parent=1 // loop_exit
      _
    %384 = vsyncpa [#allocation3], 1
    %s385 = scalar_lea.sflag [#allocation3], 1
    %386 = vsyncpa %s385, 1
    %387 = vsyncpa [#allocation6], 1
    %388 = vsyncpa [#allocation4], 1
    %s389 = scalar_lea.sflag [#allocation4], 1
    %390 = vsyncpa %s389, 1

</llo_original>
